<compile_context>
chip_gen: v5e
topology: v5e:2x2
jax: 0.10.0
libtpu: 0.0.40
codegen_flags: <defaults>
</compile_context>

<pallas_src>
import functools

import jax
import jax.numpy as jnp
from jax.experimental import pallas as pl
from jax.experimental.pallas import tpu as pltpu


def _encoder_block_kernel(x_ref, mask_ref,
                          g0_ref, b0_ref,
                          wqkv_ref, wo_ref,
                          g1_ref, b1_ref,
                          w1_ref, bias1_ref, w2_ref, bias2_ref,
                          o_ref, *, n_heads):
    x = x_ref[0].astype(jnp.float32)      # (S, D)
    mask = mask_ref[0]                    # (1, S)  1.0 = valid, 0.0 = pad
    S, D = x.shape
    dh = D // n_heads

    def layer_norm(v, g, b):
        mu = jnp.mean(v, axis=-1, keepdims=True)
        var = jnp.mean((v - mu) ** 2, axis=-1, keepdims=True)
        return (v - mu) * jax.lax.rsqrt(var + 1e-5) * g + b

    # ---- LayerNorm 0 (f32) ----
    xn = layer_norm(x, g0_ref[0], b0_ref[0])          # (S, D) f32
    xn_bf = xn.astype(jnp.bfloat16)

    # ---- fused QKV projection: one (S, 3D) bf16 matmul, f32 accumulation ----
    qkv = jnp.dot(xn_bf, wqkv_ref[...], preferred_element_type=jnp.float32)
    scale = 1.0 / jnp.sqrt(jnp.float32(dh))
    q = (qkv[:, :D] * scale).astype(jnp.bfloat16)     # scale folded into q once
    k = qkv[:, D:2 * D].astype(jnp.bfloat16)
    v = qkv[:, 2 * D:].astype(jnp.bfloat16)

    # Additive key-pad bias computed once: 0 for valid keys, -1e30 for padding.
    mask_bias = (mask - 1.0) * jnp.float32(1e30)      # (1, S)

    wo = wo_ref[...]                                  # (D, D) bf16, loaded once

    # ---- multi-head self-attention, accumulated into the out-projection ----
    # scores contract the last dims of q and k (no explicit kh.T transpose).
    dn = (((1,), (1,)), ((), ()))
    attn = jnp.zeros((S, D), jnp.float32)
    for h in range(n_heads):                          # small static loop over heads
        sl = slice(h * dh, (h + 1) * dh)
        s = jax.lax.dot_general(q[:, sl], k[:, sl], dn,
                                preferred_element_type=jnp.float32)   # (S, S) f32
        s = s + mask_bias
        s = s - jnp.max(s, axis=-1, keepdims=True)
        p = jnp.exp(s)
        p = p * pl.reciprocal(jnp.sum(p, axis=-1, keepdims=True), approx=True)
        ctx = jnp.dot(p.astype(jnp.bfloat16), v[:, sl],
                      preferred_element_type=jnp.float32)             # (S, dh)
        attn = attn + jnp.dot(ctx.astype(jnp.bfloat16), wo[sl, :],
                              preferred_element_type=jnp.float32)     # (S, D)

    # ---- residual 1 (onto the normalized x, per the torch forward) ----
    x1 = xn + attn

    # ---- LayerNorm 1 + MLP + residual 2 ----
    x1n = layer_norm(x1, g1_ref[0], b1_ref[0])
    h1 = jnp.dot(x1n.astype(jnp.bfloat16), w1_ref[...],
                 preferred_element_type=jnp.float32) + bias1_ref[0]
    h1 = jnp.maximum(h1, 0.0)                                         # ReLU (f32)
    y = jnp.dot(h1.astype(jnp.bfloat16), w2_ref[...],
                preferred_element_type=jnp.float32) + bias2_ref[0]

    o_ref[0] = (x1 + y).astype(o_ref.dtype)


def encoder_block(x, pad_mask, params, *, n_heads):
    B, S, D = x.shape
    H = params["w1_t"].shape[1]
    mask = pad_mask.astype(jnp.float32).reshape(B, 1, S)

    kernel = functools.partial(_encoder_block_kernel, n_heads=n_heads)

    def rep2(shape):
        # weights / params: same full block at every grid step
        return pl.BlockSpec(shape, lambda b: (0, 0))

    return pl.pallas_call(
        kernel,
        out_shape=jax.ShapeDtypeStruct((B, S, D), x.dtype),
        grid=(B,),
        in_specs=[
            pl.BlockSpec((1, S, D), lambda b: (b, 0, 0)),   # x, one batch row per step
            pl.BlockSpec((1, 1, S), lambda b: (b, 0, 0)),   # pad mask
            rep2((1, D)), rep2((1, D)),                     # ln0 gamma/beta (f32)
            rep2((D, 3 * D)),                               # fused [Wq|Wk|Wv]^T (bf16)
            rep2((D, D)),                                   # Wo^T (bf16)
            rep2((1, D)), rep2((1, D)),                     # ln1 gamma/beta (f32)
            rep2((D, H)), rep2((1, H)),                     # MLP W1^T (bf16), b1 (f32)
            rep2((H, D)), rep2((1, D)),                     # MLP W2^T (bf16), b2 (f32)
        ],
        out_specs=pl.BlockSpec((1, S, D), lambda b: (b, 0, 0)),
        compiler_params=pltpu.CompilerParams(dimension_semantics=("parallel",)),
    )(x, mask,
      params["g0"], params["b0"],
      params["wqkv_t"], params["wo_t"],
      params["g1"], params["b1"],
      params["w1_t"], params["bias1"], params["w2_t"], params["bias2"])


def reference(x, pad_mask, params, *, n_heads):
    """Plain-JAX f32 reference mirroring the torch forward pass."""
    B, S, D = x.shape
    dh = D // n_heads

    wqkv = params["wqkv_t"].astype(jnp.float32)
    wo = params["wo_t"].astype(jnp.float32)
    w1 = params["w1_t"].astype(jnp.float32)
    w2 = params["w2_t"].astype(jnp.float32)

    def ln(v, g, b):
        mu = v.mean(-1, keepdims=True)
        var = ((v - mu) ** 2).mean(-1, keepdims=True)
        return (v - mu) / jnp.sqrt(var + 1e-5) * g + b

    xn = ln(x, params["g0"][0], params["b0"][0])
    qkv = xn @ wqkv
    q, k, v = qkv[..., :D], qkv[..., D:2 * D], qkv[..., 2 * D:]
    q = q.reshape(B, S, n_heads, dh).transpose(0, 2, 1, 3)
    k = k.reshape(B, S, n_heads, dh).transpose(0, 2, 1, 3)
    v = v.reshape(B, S, n_heads, dh).transpose(0, 2, 1, 3)
    s = jnp.einsum("bhqd,bhkd->bhqk", q, k) / jnp.sqrt(jnp.float32(dh))
    keep = pad_mask[:, None, None, :]                       # True = valid
    s = jnp.where(keep, s, -jnp.inf)
    p = jax.nn.softmax(s, axis=-1)
    attn = jnp.einsum("bhqk,bhkd->bhqd", p, v).transpose(0, 2, 1, 3).reshape(B, S, D)
    attn = attn @ wo
    x1 = xn + attn
    x1n = ln(x1, params["g1"][0], params["b1"][0])
    h1 = jnp.maximum(x1n @ w1 + params["bias1"][0], 0.0)
    y = h1 @ w2 + params["bias2"][0]
    return x1 + y


def make_params(key, d_model, hidden_dim):
    ks = jax.random.split(key, 10)
    scale = 0.02
    # torch MultiheadAttention in_proj_weight: (3*D, D), out_proj.weight: (D, D)
    in_proj = scale * jax.random.normal(ks[0], (3 * d_model, d_model), jnp.float32)
    wo = scale * jax.random.normal(ks[1], (d_model, d_model), jnp.float32)
    w1 = scale * jax.random.normal(ks[2], (hidden_dim, d_model), jnp.float32)
    b1 = scale * jax.random.normal(ks[3], (hidden_dim,), jnp.float32)
    w2 = scale * jax.random.normal(ks[4], (d_model, hidden_dim), jnp.float32)
    b2 = scale * jax.random.normal(ks[5], (d_model,), jnp.float32)
    g0 = 1.0 + 0.1 * jax.random.normal(ks[6], (d_model,), jnp.float32)
    g1 = 1.0 + 0.1 * jax.random.normal(ks[7], (d_model,), jnp.float32)
    beta0 = 0.02 * jax.random.normal(ks[8], (d_model,), jnp.float32)
    beta1 = 0.02 * jax.random.normal(ks[9], (d_model,), jnp.float32)
    # Matmul weights stored transposed (x @ W^T == x @ W_t) and in bf16
    # (halves weight VMEM / HBM traffic; MXU runs at bf16 peak).
    return {
        "g0": g0.reshape(1, -1), "b0": beta0.reshape(1, -1),
        "g1": g1.reshape(1, -1), "b1": beta1.reshape(1, -1),
        "wqkv_t": in_proj.T.astype(jnp.bfloat16),           # (D, 3D)
        "wo_t": wo.T.astype(jnp.bfloat16),                   # (D, D)
        "w1_t": w1.T.astype(jnp.bfloat16),                   # (D, H)
        "bias1": b1.reshape(1, -1),
        "w2_t": w2.T.astype(jnp.bfloat16),                   # (H, D)
        "bias2": b2.reshape(1, -1),
    }


if __name__ == "__main__":
    B, S, D, HEADS, FF = 2, 8, 32, 4, 64

    key = jax.random.PRNGKey(0)
    kx, kp = jax.random.split(key)
    x = jax.random.normal(kx, (B, S, D), jnp.float32)
    # pad_mask: True = real token, False = padding (last 2 tokens of batch 1 padded)
    pad_mask = jnp.ones((B, S), dtype=bool).at[1, S - 2:].set(False)

    params = make_params(kp, D, FF)

    out = encoder_block(x, pad_mask, params, n_heads=HEADS)
    out = jax.block_until_ready(out)

    ref = reference(x, pad_mask, params, n_heads=HEADS)
    assert out.shape == (B, S, D)
    # bf16 matmul operands in the kernel vs f32 reference -> modest tolerance.
    assert jnp.allclose(out, ref, rtol=1e-2, atol=1e-2), "mismatch vs JAX reference"

    print("KERNEL_OK")
</pallas_src>

<mosaic_0001>
module attributes {stable_mosaic.version = 11 : i64} {
  func.func @_encoder_block_kernel(%arg0: i32, %arg1: memref<1x8x32xf32, #tpu.memory_space<vmem>>, %arg2: memref<1x1x8xf32, #tpu.memory_space<vmem>>, %arg3: memref<1x32xf32, #tpu.memory_space<vmem>>, %arg4: memref<1x32xf32, #tpu.memory_space<vmem>>, %arg5: memref<32x96xbf16, #tpu.memory_space<vmem>>, %arg6: memref<32x32xbf16, #tpu.memory_space<vmem>>, %arg7: memref<1x32xf32, #tpu.memory_space<vmem>>, %arg8: memref<1x32xf32, #tpu.memory_space<vmem>>, %arg9: memref<32x64xbf16, #tpu.memory_space<vmem>>, %arg10: memref<1x64xf32, #tpu.memory_space<vmem>>, %arg11: memref<64x32xbf16, #tpu.memory_space<vmem>>, %arg12: memref<1x32xf32, #tpu.memory_space<vmem>>, %arg13: memref<1x8x32xf32, #tpu.memory_space<vmem>>) attributes {dimension_semantics = [#tpu.dimension_semantics<parallel>], iteration_bounds = array<i64: 2>, scalar_prefetch = 0 : i64, scratch_operands = 0 : i64, tpu.core_type = #tpu.core_type<tc>, window_params = [{transform_indices = @transform_0, window_bounds = array<i64: 1, 8, 32>}, {transform_indices = @transform_1, window_bounds = array<i64: 1, 1, 8>}, {pipeline_mode = #tpu.pipeline_mode<synchronous>, transform_indices = @transform_2, window_bounds = array<i64: 1, 32>}, {pipeline_mode = #tpu.pipeline_mode<synchronous>, transform_indices = @transform_3, window_bounds = array<i64: 1, 32>}, {pipeline_mode = #tpu.pipeline_mode<synchronous>, transform_indices = @transform_4, window_bounds = array<i64: 32, 96>}, {pipeline_mode = #tpu.pipeline_mode<synchronous>, transform_indices = @transform_5, window_bounds = array<i64: 32, 32>}, {pipeline_mode = #tpu.pipeline_mode<synchronous>, transform_indices = @transform_6, window_bounds = array<i64: 1, 32>}, {pipeline_mode = #tpu.pipeline_mode<synchronous>, transform_indices = @transform_7, window_bounds = array<i64: 1, 32>}, {pipeline_mode = #tpu.pipeline_mode<synchronous>, transform_indices = @transform_8, window_bounds = array<i64: 32, 64>}, {pipeline_mode = #tpu.pipeline_mode<synchronous>, transform_indices = @transform_9, window_bounds = array<i64: 1, 64>}, {pipeline_mode = #tpu.pipeline_mode<synchronous>, transform_indices = @transform_10, window_bounds = array<i64: 64, 32>}, {pipeline_mode = #tpu.pipeline_mode<synchronous>, transform_indices = @transform_11, window_bounds = array<i64: 1, 32>}, {transform_indices = @transform_12, window_bounds = array<i64: 1, 8, 32>}]} {
    %c0 = arith.constant 0 : index
    %c0_0 = arith.constant 0 : index
    %c0_1 = arith.constant 0 : index
    %0 = vector.load %arg1[%c0, %c0_0, %c0_1] : memref<1x8x32xf32, #tpu.memory_space<vmem>>, vector<1x8x32xf32>
    %1 = vector.shape_cast %0 : vector<1x8x32xf32> to vector<8x32xf32>
    %c0_2 = arith.constant 0 : index
    %c0_3 = arith.constant 0 : index
    %c0_4 = arith.constant 0 : index
    %2 = vector.load %arg2[%c0_2, %c0_3, %c0_4] : memref<1x1x8xf32, #tpu.memory_space<vmem>>, vector<1x1x8xf32>
    %3 = vector.shape_cast %2 : vector<1x1x8xf32> to vector<1x8xf32>
    %c0_5 = arith.constant 0 : index
    %c0_6 = arith.constant 0 : index
    %4 = vector.load %arg3[%c0_5, %c0_6] : memref<1x32xf32, #tpu.memory_space<vmem>>, vector<1x32xf32>
    %5 = vector.shape_cast %4 : vector<1x32xf32> to vector<32xf32>
    %c0_7 = arith.constant 0 : index
    %c0_8 = arith.constant 0 : index
    %6 = vector.load %arg4[%c0_7, %c0_8] : memref<1x32xf32, #tpu.memory_space<vmem>>, vector<1x32xf32>
    %7 = vector.shape_cast %6 : vector<1x32xf32> to vector<32xf32>
    %cst = arith.constant dense<0.000000e+00> : vector<8xf32>
    %8 = vector.multi_reduction <add>, %1, %cst [1] : vector<8x32xf32> to vector<8xf32>
    %9 = vector.shape_cast %8 : vector<8xf32> to vector<8x1xf32>
    %cst_9 = arith.constant 3.200000e+01 : f32
    %10 = vector.broadcast %cst_9 : f32 to vector<8x1xf32>
    %11 = arith.divf %9, %10 : vector<8x1xf32>
    %12 = vector.broadcast %11 : vector<8x1xf32> to vector<8x32xf32>
    %13 = arith.subf %1, %12 : vector<8x32xf32>
    %14 = arith.mulf %13, %13 : vector<8x32xf32>
    %cst_10 = arith.constant dense<0.000000e+00> : vector<8xf32>
    %15 = vector.multi_reduction <add>, %14, %cst_10 [1] : vector<8x32xf32> to vector<8xf32>
    %16 = vector.shape_cast %15 : vector<8xf32> to vector<8x1xf32>
    %cst_11 = arith.constant 3.200000e+01 : f32
    %17 = vector.broadcast %cst_11 : f32 to vector<8x1xf32>
    %18 = arith.divf %16, %17 : vector<8x1xf32>
    %19 = vector.broadcast %11 : vector<8x1xf32> to vector<8x32xf32>
    %20 = arith.subf %1, %19 : vector<8x32xf32>
    %cst_12 = arith.constant 9.99999974E-6 : f32
    %21 = vector.broadcast %cst_12 : f32 to vector<8x1xf32>
    %22 = arith.addf %18, %21 : vector<8x1xf32>
    %23 = math.rsqrt %22 : vector<8x1xf32>
    %24 = vector.broadcast %23 : vector<8x1xf32> to vector<8x32xf32>
    %25 = arith.mulf %20, %24 : vector<8x32xf32>
    %26 = vector.shape_cast %5 : vector<32xf32> to vector<1x32xf32>
    %27 = vector.broadcast %26 : vector<1x32xf32> to vector<8x32xf32>
    %28 = arith.mulf %25, %27 : vector<8x32xf32>
    %29 = vector.shape_cast %7 : vector<32xf32> to vector<1x32xf32>
    %30 = vector.broadcast %29 : vector<1x32xf32> to vector<8x32xf32>
    %31 = arith.addf %28, %30 : vector<8x32xf32>
    %32 = arith.truncf %31 : vector<8x32xf32> to vector<8x32xbf16>
    %c0_13 = arith.constant 0 : index
    %c0_14 = arith.constant 0 : index
    %33 = vector.load %arg5[%c0_13, %c0_14] : memref<32x96xbf16, #tpu.memory_space<vmem>>, vector<32x96xbf16>
    %cst_15 = arith.constant dense<0.000000e+00> : vector<8x96xf32>
    %34 = tpu.matmul %32, %33, %cst_15 {dimension_numbers = #tpu.dot_dimension_numbers<[1], [0], [0], [1], [0, 0, 1, 1], [], []>} : vector<8x32xbf16>, vector<32x96xbf16>, vector<8x96xf32> -> vector<8x96xf32>
    %cst_16 = arith.constant 8.000000e+00 : f32
    %35 = math.sqrt %cst_16 : f32
    %cst_17 = arith.constant 1.000000e+00 : f32
    %36 = arith.divf %cst_17, %35 : f32
    %37 = vector.extract_strided_slice %34 {offsets = [0, 0], sizes = [8, 32], strides = [1, 1]} : vector<8x96xf32> to vector<8x32xf32>
    %38 = vector.broadcast %36 : f32 to vector<8x32xf32>
    %39 = arith.mulf %37, %38 : vector<8x32xf32>
    %40 = arith.truncf %39 : vector<8x32xf32> to vector<8x32xbf16>
    %41 = vector.extract_strided_slice %34 {offsets = [0, 32], sizes = [8, 32], strides = [1, 1]} : vector<8x96xf32> to vector<8x32xf32>
    %42 = arith.truncf %41 : vector<8x32xf32> to vector<8x32xbf16>
    %43 = vector.extract_strided_slice %34 {offsets = [0, 64], sizes = [8, 32], strides = [1, 1]} : vector<8x96xf32> to vector<8x32xf32>
    %44 = arith.truncf %43 : vector<8x32xf32> to vector<8x32xbf16>
    %cst_18 = arith.constant 1.000000e+00 : f32
    %45 = vector.broadcast %cst_18 : f32 to vector<1x8xf32>
    %46 = arith.subf %3, %45 : vector<1x8xf32>
    %cst_19 = arith.constant 1.000000e+30 : f32
    %47 = vector.broadcast %cst_19 : f32 to vector<1x8xf32>
    %48 = arith.mulf %46, %47 : vector<1x8xf32>
    %c0_20 = arith.constant 0 : index
    %c0_21 = arith.constant 0 : index
    %49 = vector.load %arg6[%c0_20, %c0_21] : memref<32x32xbf16, #tpu.memory_space<vmem>>, vector<32x32xbf16>
    %cst_22 = arith.constant 0.000000e+00 : f32
    %50 = vector.broadcast %cst_22 : f32 to vector<8x32xf32>
    %51 = vector.extract_strided_slice %40 {offsets = [0, 0], sizes = [8, 8], strides = [1, 1]} : vector<8x32xbf16> to vector<8x8xbf16>
    %52 = vector.extract_strided_slice %42 {offsets = [0, 0], sizes = [8, 8], strides = [1, 1]} : vector<8x32xbf16> to vector<8x8xbf16>
    %cst_23 = arith.constant dense<0.000000e+00> : vector<8x8xf32>
    %53 = tpu.matmul %51, %52, %cst_23 {dimension_numbers = #tpu.dot_dimension_numbers<[1], [1], [0], [0], [0, 0, 1, 0], [], []>} : vector<8x8xbf16>, vector<8x8xbf16>, vector<8x8xf32> -> vector<8x8xf32>
    %54 = vector.broadcast %48 : vector<1x8xf32> to vector<8x8xf32>
    %55 = arith.addf %53, %54 : vector<8x8xf32>
    %cst_24 = arith.constant dense<0xFF800000> : vector<8xf32>
    %56 = vector.multi_reduction <maximumf>, %55, %cst_24 [1] : vector<8x8xf32> to vector<8xf32>
    %57 = vector.shape_cast %56 : vector<8xf32> to vector<8x1xf32>
    %58 = vector.broadcast %57 : vector<8x1xf32> to vector<8x8xf32>
    %59 = arith.subf %55, %58 : vector<8x8xf32>
    %60 = math.exp %59 : vector<8x8xf32>
    %cst_25 = arith.constant dense<0.000000e+00> : vector<8xf32>
    %61 = vector.multi_reduction <add>, %60, %cst_25 [1] : vector<8x8xf32> to vector<8xf32>
    %62 = vector.shape_cast %61 : vector<8xf32> to vector<8x1xf32>
    %63 = tpu.reciprocal %62 {approx = true} : vector<8x1xf32> -> vector<8x1xf32>
    %64 = vector.broadcast %63 : vector<8x1xf32> to vector<8x8xf32>
    %65 = arith.mulf %60, %64 : vector<8x8xf32>
    %66 = arith.truncf %65 : vector<8x8xf32> to vector<8x8xbf16>
    %67 = vector.extract_strided_slice %44 {offsets = [0, 0], sizes = [8, 8], strides = [1, 1]} : vector<8x32xbf16> to vector<8x8xbf16>
    %cst_26 = arith.constant dense<0.000000e+00> : vector<8x8xf32>
    %68 = tpu.matmul %66, %67, %cst_26 {dimension_numbers = #tpu.dot_dimension_numbers<[1], [0], [0], [1], [0, 0, 1, 1], [], []>} : vector<8x8xbf16>, vector<8x8xbf16>, vector<8x8xf32> -> vector<8x8xf32>
    %69 = arith.truncf %68 : vector<8x8xf32> to vector<8x8xbf16>
    %70 = vector.extract_strided_slice %49 {offsets = [0, 0], sizes = [8, 32], strides = [1, 1]} : vector<32x32xbf16> to vector<8x32xbf16>
    %cst_27 = arith.constant dense<0.000000e+00> : vector<8x32xf32>
    %71 = tpu.matmul %69, %70, %cst_27 {dimension_numbers = #tpu.dot_dimension_numbers<[1], [0], [0], [1], [0, 0, 1, 1], [], []>} : vector<8x8xbf16>, vector<8x32xbf16>, vector<8x32xf32> -> vector<8x32xf32>
    %72 = arith.addf %50, %71 : vector<8x32xf32>
    %73 = vector.extract_strided_slice %40 {offsets = [0, 8], sizes = [8, 8], strides = [1, 1]} : vector<8x32xbf16> to vector<8x8xbf16>
    %74 = vector.extract_strided_slice %42 {offsets = [0, 8], sizes = [8, 8], strides = [1, 1]} : vector<8x32xbf16> to vector<8x8xbf16>
    %cst_28 = arith.constant dense<0.000000e+00> : vector<8x8xf32>
    %75 = tpu.matmul %73, %74, %cst_28 {dimension_numbers = #tpu.dot_dimension_numbers<[1], [1], [0], [0], [0, 0, 1, 0], [], []>} : vector<8x8xbf16>, vector<8x8xbf16>, vector<8x8xf32> -> vector<8x8xf32>
    %76 = vector.broadcast %48 : vector<1x8xf32> to vector<8x8xf32>
    %77 = arith.addf %75, %76 : vector<8x8xf32>
    %cst_29 = arith.constant dense<0xFF800000> : vector<8xf32>
    %78 = vector.multi_reduction <maximumf>, %77, %cst_29 [1] : vector<8x8xf32> to vector<8xf32>
    %79 = vector.shape_cast %78 : vector<8xf32> to vector<8x1xf32>
    %80 = vector.broadcast %79 : vector<8x1xf32> to vector<8x8xf32>
    %81 = arith.subf %77, %80 : vector<8x8xf32>
    %82 = math.exp %81 : vector<8x8xf32>
    %cst_30 = arith.constant dense<0.000000e+00> : vector<8xf32>
    %83 = vector.multi_reduction <add>, %82, %cst_30 [1] : vector<8x8xf32> to vector<8xf32>
    %84 = vector.shape_cast %83 : vector<8xf32> to vector<8x1xf32>
    %85 = tpu.reciprocal %84 {approx = true} : vector<8x1xf32> -> vector<8x1xf32>
    %86 = vector.broadcast %85 : vector<8x1xf32> to vector<8x8xf32>
    %87 = arith.mulf %82, %86 : vector<8x8xf32>
    %88 = arith.truncf %87 : vector<8x8xf32> to vector<8x8xbf16>
    %89 = vector.extract_strided_slice %44 {offsets = [0, 8], sizes = [8, 8], strides = [1, 1]} : vector<8x32xbf16> to vector<8x8xbf16>
    %cst_31 = arith.constant dense<0.000000e+00> : vector<8x8xf32>
    %90 = tpu.matmul %88, %89, %cst_31 {dimension_numbers = #tpu.dot_dimension_numbers<[1], [0], [0], [1], [0, 0, 1, 1], [], []>} : vector<8x8xbf16>, vector<8x8xbf16>, vector<8x8xf32> -> vector<8x8xf32>
    %91 = arith.truncf %90 : vector<8x8xf32> to vector<8x8xbf16>
    %92 = vector.extract_strided_slice %49 {offsets = [8, 0], sizes = [8, 32], strides = [1, 1]} : vector<32x32xbf16> to vector<8x32xbf16>
    %cst_32 = arith.constant dense<0.000000e+00> : vector<8x32xf32>
    %93 = tpu.matmul %91, %92, %cst_32 {dimension_numbers = #tpu.dot_dimension_numbers<[1], [0], [0], [1], [0, 0, 1, 1], [], []>} : vector<8x8xbf16>, vector<8x32xbf16>, vector<8x32xf32> -> vector<8x32xf32>
    %94 = arith.addf %72, %93 : vector<8x32xf32>
    %95 = vector.extract_strided_slice %40 {offsets = [0, 16], sizes = [8, 8], strides = [1, 1]} : vector<8x32xbf16> to vector<8x8xbf16>
    %96 = vector.extract_strided_slice %42 {offsets = [0, 16], sizes = [8, 8], strides = [1, 1]} : vector<8x32xbf16> to vector<8x8xbf16>
    %cst_33 = arith.constant dense<0.000000e+00> : vector<8x8xf32>
    %97 = tpu.matmul %95, %96, %cst_33 {dimension_numbers = #tpu.dot_dimension_numbers<[1], [1], [0], [0], [0, 0, 1, 0], [], []>} : vector<8x8xbf16>, vector<8x8xbf16>, vector<8x8xf32> -> vector<8x8xf32>
    %98 = vector.broadcast %48 : vector<1x8xf32> to vector<8x8xf32>
    %99 = arith.addf %97, %98 : vector<8x8xf32>
    %cst_34 = arith.constant dense<0xFF800000> : vector<8xf32>
    %100 = vector.multi_reduction <maximumf>, %99, %cst_34 [1] : vector<8x8xf32> to vector<8xf32>
    %101 = vector.shape_cast %100 : vector<8xf32> to vector<8x1xf32>
    %102 = vector.broadcast %101 : vector<8x1xf32> to vector<8x8xf32>
    %103 = arith.subf %99, %102 : vector<8x8xf32>
    %104 = math.exp %103 : vector<8x8xf32>
    %cst_35 = arith.constant dense<0.000000e+00> : vector<8xf32>
    %105 = vector.multi_reduction <add>, %104, %cst_35 [1] : vector<8x8xf32> to vector<8xf32>
    %106 = vector.shape_cast %105 : vector<8xf32> to vector<8x1xf32>
    %107 = tpu.reciprocal %106 {approx = true} : vector<8x1xf32> -> vector<8x1xf32>
    %108 = vector.broadcast %107 : vector<8x1xf32> to vector<8x8xf32>
    %109 = arith.mulf %104, %108 : vector<8x8xf32>
    %110 = arith.truncf %109 : vector<8x8xf32> to vector<8x8xbf16>
    %111 = vector.extract_strided_slice %44 {offsets = [0, 16], sizes = [8, 8], strides = [1, 1]} : vector<8x32xbf16> to vector<8x8xbf16>
    %cst_36 = arith.constant dense<0.000000e+00> : vector<8x8xf32>
    %112 = tpu.matmul %110, %111, %cst_36 {dimension_numbers = #tpu.dot_dimension_numbers<[1], [0], [0], [1], [0, 0, 1, 1], [], []>} : vector<8x8xbf16>, vector<8x8xbf16>, vector<8x8xf32> -> vector<8x8xf32>
    %113 = arith.truncf %112 : vector<8x8xf32> to vector<8x8xbf16>
    %114 = vector.extract_strided_slice %49 {offsets = [16, 0], sizes = [8, 32], strides = [1, 1]} : vector<32x32xbf16> to vector<8x32xbf16>
    %cst_37 = arith.constant dense<0.000000e+00> : vector<8x32xf32>
    %115 = tpu.matmul %113, %114, %cst_37 {dimension_numbers = #tpu.dot_dimension_numbers<[1], [0], [0], [1], [0, 0, 1, 1], [], []>} : vector<8x8xbf16>, vector<8x32xbf16>, vector<8x32xf32> -> vector<8x32xf32>
    %116 = arith.addf %94, %115 : vector<8x32xf32>
    %117 = vector.extract_strided_slice %40 {offsets = [0, 24], sizes = [8, 8], strides = [1, 1]} : vector<8x32xbf16> to vector<8x8xbf16>
    %118 = vector.extract_strided_slice %42 {offsets = [0, 24], sizes = [8, 8], strides = [1, 1]} : vector<8x32xbf16> to vector<8x8xbf16>
    %cst_38 = arith.constant dense<0.000000e+00> : vector<8x8xf32>
    %119 = tpu.matmul %117, %118, %cst_38 {dimension_numbers = #tpu.dot_dimension_numbers<[1], [1], [0], [0], [0, 0, 1, 0], [], []>} : vector<8x8xbf16>, vector<8x8xbf16>, vector<8x8xf32> -> vector<8x8xf32>
    %120 = vector.broadcast %48 : vector<1x8xf32> to vector<8x8xf32>
    %121 = arith.addf %119, %120 : vector<8x8xf32>
    %cst_39 = arith.constant dense<0xFF800000> : vector<8xf32>
    %122 = vector.multi_reduction <maximumf>, %121, %cst_39 [1] : vector<8x8xf32> to vector<8xf32>
    %123 = vector.shape_cast %122 : vector<8xf32> to vector<8x1xf32>
    %124 = vector.broadcast %123 : vector<8x1xf32> to vector<8x8xf32>
    %125 = arith.subf %121, %124 : vector<8x8xf32>
    %126 = math.exp %125 : vector<8x8xf32>
    %cst_40 = arith.constant dense<0.000000e+00> : vector<8xf32>
    %127 = vector.multi_reduction <add>, %126, %cst_40 [1] : vector<8x8xf32> to vector<8xf32>
    %128 = vector.shape_cast %127 : vector<8xf32> to vector<8x1xf32>
    %129 = tpu.reciprocal %128 {approx = true} : vector<8x1xf32> -> vector<8x1xf32>
    %130 = vector.broadcast %129 : vector<8x1xf32> to vector<8x8xf32>
    %131 = arith.mulf %126, %130 : vector<8x8xf32>
    %132 = arith.truncf %131 : vector<8x8xf32> to vector<8x8xbf16>
    %133 = vector.extract_strided_slice %44 {offsets = [0, 24], sizes = [8, 8], strides = [1, 1]} : vector<8x32xbf16> to vector<8x8xbf16>
    %cst_41 = arith.constant dense<0.000000e+00> : vector<8x8xf32>
    %134 = tpu.matmul %132, %133, %cst_41 {dimension_numbers = #tpu.dot_dimension_numbers<[1], [0], [0], [1], [0, 0, 1, 1], [], []>} : vector<8x8xbf16>, vector<8x8xbf16>, vector<8x8xf32> -> vector<8x8xf32>
    %135 = arith.truncf %134 : vector<8x8xf32> to vector<8x8xbf16>
    %136 = vector.extract_strided_slice %49 {offsets = [24, 0], sizes = [8, 32], strides = [1, 1]} : vector<32x32xbf16> to vector<8x32xbf16>
    %cst_42 = arith.constant dense<0.000000e+00> : vector<8x32xf32>
    %137 = tpu.matmul %135, %136, %cst_42 {dimension_numbers = #tpu.dot_dimension_numbers<[1], [0], [0], [1], [0, 0, 1, 1], [], []>} : vector<8x8xbf16>, vector<8x32xbf16>, vector<8x32xf32> -> vector<8x32xf32>
    %138 = arith.addf %116, %137 : vector<8x32xf32>
    %139 = arith.addf %31, %138 : vector<8x32xf32>
    %c0_43 = arith.constant 0 : index
    %c0_44 = arith.constant 0 : index
    %140 = vector.load %arg7[%c0_43, %c0_44] : memref<1x32xf32, #tpu.memory_space<vmem>>, vector<1x32xf32>
    %141 = vector.shape_cast %140 : vector<1x32xf32> to vector<32xf32>
    %c0_45 = arith.constant 0 : index
    %c0_46 = arith.constant 0 : index
    %142 = vector.load %arg8[%c0_45, %c0_46] : memref<1x32xf32, #tpu.memory_space<vmem>>, vector<1x32xf32>
    %143 = vector.shape_cast %142 : vector<1x32xf32> to vector<32xf32>
    %cst_47 = arith.constant dense<0.000000e+00> : vector<8xf32>
    %144 = vector.multi_reduction <add>, %139, %cst_47 [1] : vector<8x32xf32> to vector<8xf32>
    %145 = vector.shape_cast %144 : vector<8xf32> to vector<8x1xf32>
    %cst_48 = arith.constant 3.200000e+01 : f32
    %146 = vector.broadcast %cst_48 : f32 to vector<8x1xf32>
    %147 = arith.divf %145, %146 : vector<8x1xf32>
    %148 = vector.broadcast %147 : vector<8x1xf32> to vector<8x32xf32>
    %149 = arith.subf %139, %148 : vector<8x32xf32>
    %150 = arith.mulf %149, %149 : vector<8x32xf32>
    %cst_49 = arith.constant dense<0.000000e+00> : vector<8xf32>
    %151 = vector.multi_reduction <add>, %150, %cst_49 [1] : vector<8x32xf32> to vector<8xf32>
    %152 = vector.shape_cast %151 : vector<8xf32> to vector<8x1xf32>
    %cst_50 = arith.constant 3.200000e+01 : f32
    %153 = vector.broadcast %cst_50 : f32 to vector<8x1xf32>
    %154 = arith.divf %152, %153 : vector<8x1xf32>
    %155 = vector.broadcast %147 : vector<8x1xf32> to vector<8x32xf32>
    %156 = arith.subf %139, %155 : vector<8x32xf32>
    %cst_51 = arith.constant 9.99999974E-6 : f32
    %157 = vector.broadcast %cst_51 : f32 to vector<8x1xf32>
    %158 = arith.addf %154, %157 : vector<8x1xf32>
    %159 = math.rsqrt %158 : vector<8x1xf32>
    %160 = vector.broadcast %159 : vector<8x1xf32> to vector<8x32xf32>
    %161 = arith.mulf %156, %160 : vector<8x32xf32>
    %162 = vector.shape_cast %141 : vector<32xf32> to vector<1x32xf32>
    %163 = vector.broadcast %162 : vector<1x32xf32> to vector<8x32xf32>
    %164 = arith.mulf %161, %163 : vector<8x32xf32>
    %165 = vector.shape_cast %143 : vector<32xf32> to vector<1x32xf32>
    %166 = vector.broadcast %165 : vector<1x32xf32> to vector<8x32xf32>
    %167 = arith.addf %164, %166 : vector<8x32xf32>
    %168 = arith.truncf %167 : vector<8x32xf32> to vector<8x32xbf16>
    %c0_52 = arith.constant 0 : index
    %c0_53 = arith.constant 0 : index
    %169 = vector.load %arg9[%c0_52, %c0_53] : memref<32x64xbf16, #tpu.memory_space<vmem>>, vector<32x64xbf16>
    %cst_54 = arith.constant dense<0.000000e+00> : vector<8x64xf32>
    %170 = tpu.matmul %168, %169, %cst_54 {dimension_numbers = #tpu.dot_dimension_numbers<[1], [0], [0], [1], [0, 0, 1, 1], [], []>} : vector<8x32xbf16>, vector<32x64xbf16>, vector<8x64xf32> -> vector<8x64xf32>
    %c0_55 = arith.constant 0 : index
    %c0_56 = arith.constant 0 : index
    %171 = vector.load %arg10[%c0_55, %c0_56] : memref<1x64xf32, #tpu.memory_space<vmem>>, vector<1x64xf32>
    %172 = vector.shape_cast %171 : vector<1x64xf32> to vector<64xf32>
    %173 = vector.shape_cast %172 : vector<64xf32> to vector<1x64xf32>
    %174 = vector.broadcast %173 : vector<1x64xf32> to vector<8x64xf32>
    %175 = arith.addf %170, %174 : vector<8x64xf32>
    %cst_57 = arith.constant 0.000000e+00 : f32
    %176 = vector.broadcast %cst_57 : f32 to vector<8x64xf32>
    %177 = arith.maximumf %175, %176 : vector<8x64xf32>
    %178 = arith.truncf %177 : vector<8x64xf32> to vector<8x64xbf16>
    %c0_58 = arith.constant 0 : index
    %c0_59 = arith.constant 0 : index
    %179 = vector.load %arg11[%c0_58, %c0_59] : memref<64x32xbf16, #tpu.memory_space<vmem>>, vector<64x32xbf16>
    %cst_60 = arith.constant dense<0.000000e+00> : vector<8x32xf32>
    %180 = tpu.matmul %178, %179, %cst_60 {dimension_numbers = #tpu.dot_dimension_numbers<[1], [0], [0], [1], [0, 0, 1, 1], [], []>} : vector<8x64xbf16>, vector<64x32xbf16>, vector<8x32xf32> -> vector<8x32xf32>
    %c0_61 = arith.constant 0 : index
    %c0_62 = arith.constant 0 : index
    %181 = vector.load %arg12[%c0_61, %c0_62] : memref<1x32xf32, #tpu.memory_space<vmem>>, vector<1x32xf32>
    %182 = vector.shape_cast %181 : vector<1x32xf32> to vector<32xf32>
    %183 = vector.shape_cast %182 : vector<32xf32> to vector<1x32xf32>
    %184 = vector.broadcast %183 : vector<1x32xf32> to vector<8x32xf32>
    %185 = arith.addf %180, %184 : vector<8x32xf32>
    %186 = arith.addf %139, %185 : vector<8x32xf32>
    %c0_63 = arith.constant 0 : index
    %c0_64 = arith.constant 0 : index
    %c0_65 = arith.constant 0 : index
    %187 = vector.load %arg13[%c0_63, %c0_64, %c0_65] : memref<1x8x32xf32, #tpu.memory_space<vmem>>, vector<1x8x32xf32>
    %188 = vector.shape_cast %187 : vector<1x8x32xf32> to vector<8x32xf32>
    %189 = vector.shape_cast %186 : vector<8x32xf32> to vector<1x8x32xf32>
    tpu.vector_store %arg13[%c0_63, %c0_64, %c0_65], %189 {strides = array<i32>} : memref<1x8x32xf32, #tpu.memory_space<vmem>>, vector<1x8x32xf32>,
    return
  }
  func.func @transform_0(%arg0: i32) -> (i32, i32, i32) {
    %c0_i32 = arith.constant 0 : i32
    %c0_i32_0 = arith.constant 0 : i32
    %c0_i32_1 = arith.constant 0 : i32
    return %arg0, %c0_i32, %c0_i32_0 : i32, i32, i32
  }
  func.func @transform_1(%arg0: i32) -> (i32, i32, i32) {
    %c0_i32 = arith.constant 0 : i32
    %c0_i32_0 = arith.constant 0 : i32
    %c0_i32_1 = arith.constant 0 : i32
    return %arg0, %c0_i32, %c0_i32_0 : i32, i32, i32
  }
  func.func @transform_2(%arg0: i32) -> (i32, i32) {
    %c0_i32 = arith.constant 0 : i32
    %c0_i32_0 = arith.constant 0 : i32
    %c0_i32_1 = arith.constant 0 : i32
    return %c0_i32, %c0_i32_0 : i32, i32
  }
  func.func @transform_3(%arg0: i32) -> (i32, i32) {
    %c0_i32 = arith.constant 0 : i32
    %c0_i32_0 = arith.constant 0 : i32
    %c0_i32_1 = arith.constant 0 : i32
    return %c0_i32, %c0_i32_0 : i32, i32
  }
  func.func @transform_4(%arg0: i32) -> (i32, i32) {
    %c0_i32 = arith.constant 0 : i32
    %c0_i32_0 = arith.constant 0 : i32
    %c0_i32_1 = arith.constant 0 : i32
    return %c0_i32, %c0_i32_0 : i32, i32
  }
  func.func @transform_5(%arg0: i32) -> (i32, i32) {
    %c0_i32 = arith.constant 0 : i32
    %c0_i32_0 = arith.constant 0 : i32
    %c0_i32_1 = arith.constant 0 : i32
    return %c0_i32, %c0_i32_0 : i32, i32
  }
  func.func @transform_6(%arg0: i32) -> (i32, i32) {
    %c0_i32 = arith.constant 0 : i32
    %c0_i32_0 = arith.constant 0 : i32
    %c0_i32_1 = arith.constant 0 : i32
    return %c0_i32, %c0_i32_0 : i32, i32
  }
  func.func @transform_7(%arg0: i32) -> (i32, i32) {
    %c0_i32 = arith.constant 0 : i32
    %c0_i32_0 = arith.constant 0 : i32
    %c0_i32_1 = arith.constant 0 : i32
    return %c0_i32, %c0_i32_0 : i32, i32
  }
  func.func @transform_8(%arg0: i32) -> (i32, i32) {
    %c0_i32 = arith.constant 0 : i32
    %c0_i32_0 = arith.constant 0 : i32
    %c0_i32_1 = arith.constant 0 : i32
    return %c0_i32, %c0_i32_0 : i32, i32
  }
  func.func @transform_9(%arg0: i32) -> (i32, i32) {
    %c0_i32 = arith.constant 0 : i32
    %c0_i32_0 = arith.constant 0 : i32
    %c0_i32_1 = arith.constant 0 : i32
    return %c0_i32, %c0_i32_0 : i32, i32
  }
  func.func @transform_10(%arg0: i32) -> (i32, i32) {
    %c0_i32 = arith.constant 0 : i32
    %c0_i32_0 = arith.constant 0 : i32
    %c0_i32_1 = arith.constant 0 : i32
    return %c0_i32, %c0_i32_0 : i32, i32
  }
  func.func @transform_11(%arg0: i32) -> (i32, i32) {
    %c0_i32 = arith.constant 0 : i32
    %c0_i32_0 = arith.constant 0 : i32
    %c0_i32_1 = arith.constant 0 : i32
    return %c0_i32, %c0_i32_0 : i32, i32
  }
  func.func @transform_12(%arg0: i32) -> (i32, i32, i32) {
    %c0_i32 = arith.constant 0 : i32
    %c0_i32_0 = arith.constant 0 : i32
    %c0_i32_1 = arith.constant 0 : i32
    return %arg0, %c0_i32, %c0_i32_0 : i32, i32, i32
  }
}

</mosaic_0001>

<llo_original>
// kernel: tpu_custom_call.1
$region0: #{tpu_custom_call.1}
  #allocation0 [shape = 'u32[]', space=smem, size = 0x4, offset = 0x4, fixed_abs, tag = 'smem constant byte address 0x4 - core index']
  #allocation1 [shape = 'u32[72,128]{1,0:T(1,128)}', space=vmem, size = 0x9000, scoped, tag = 'internal scratch']
  %s0 = inlined_call_operand.vmem [shape: f32[2,8,32], index: 0, kind: input, shape index: {}]
  %s1 = inlined_call_operand.hbm [shape: f32[2,1,8], index: 1, kind: input, shape index: {}]
  %s2 = inlined_call_operand.vmem [shape: f32[1,32], index: 2, kind: input, shape index: {}]
  %s3 = inlined_call_operand.vmem [shape: f32[1,32], index: 3, kind: input, shape index: {}]
  %s4 = inlined_call_operand.vmem [shape: bf16[32,96], index: 4, kind: input, shape index: {}]
  %s5 = inlined_call_operand.vmem [shape: bf16[32,32], index: 5, kind: input, shape index: {}]
  %s6 = inlined_call_operand.vmem [shape: f32[1,32], index: 6, kind: input, shape index: {}]
  %s7 = inlined_call_operand.vmem [shape: f32[1,32], index: 7, kind: input, shape index: {}]
  %s8 = inlined_call_operand.hbm [shape: bf16[32,64], index: 8, kind: input, shape index: {}]
  %s9 = inlined_call_operand.vmem [shape: f32[1,64], index: 9, kind: input, shape index: {}]
  %s10 = inlined_call_operand.vmem [shape: bf16[64,32], index: 10, kind: input, shape index: {}]
  %s11 = inlined_call_operand.vmem [shape: f32[1,32], index: 11, kind: input, shape index: {}]
  %s12 = inlined_call_operand.hbm [shape: f32[2,8,32], index: 12, kind: output, shape index: {}]
  %s13 = sld [smem:[#allocation0]]
  $region89: #{tpu_custom_call.1} parent=0
    _
  %s15 = ssub.s32 1, %s13
  %s16 = scalar_select 0, %s15, %s13
  $region1: #{tpu_custom_call.1} parent=0
    #allocation2 [shape = 'u8[1024]{0}', space=vmem, size = 0x400, scoped, tag = 'input window, operand 1']
    #allocation3 [shape = 's32[2]{0}', space=sflag, size = 0x8, scoped, tag = 'scoped memory for tpu_custom_call.1']
    #allocation4 [shape = 's32[2]{0}', space=sflag, size = 0x8, scoped, tag = 'scoped memory for tpu_custom_call.1']
    #allocation5 [shape = 'u8[8192]{0}', space=vmem, size = 0x2000, scoped, tag = 'input window, operand 8, single buffered']
    #allocation6 [shape = 's32[1]{0}', space=sflag, size = 0x4, scoped, tag = 'scoped memory for tpu_custom_call.1']
    #allocation7 [shape = 'u8[8192]{0}', space=vmem, size = 0x2000, scoped, tag = 'output window, operand 0']
    %17 = vsyncpa [#allocation3], 0
    %s18 = scalar_lea.sflag [#allocation3], 1
    %19 = vsyncpa %s18, 0
    %20 = vsyncpa [#allocation6], 0
    %21 = vsyncpa [#allocation4], 0
    %s22 = scalar_lea.sflag [#allocation4], 1
    %23 = vsyncpa %s22, 0
    loop: start=0, step=1, limit=4
    $region2: #{tpu_custom_call.1} parent=1 // loop_pre_header
      _
    $region3: #{tpu_custom_call.1} parent=1 // loop_header
      %s25 = sphi 0, %s29
      %p26 = scmp.ge.s32.totalorder %s25, 4
      %s35 = sphi 0, %s37
      %s38 = sphi 0, %s35
      %s39 = sphi 0, %s38
      %s55 = sphi 0, %s39
      %s61 = sphi 0, %s63
      %s64 = sphi 0, %s61
      %s65 = sphi 0, %s64
      %s81 = sphi 0, %s65
      %s85 = sphi 0, %s85
      %s87 = sphi 0, %s85
      %s88 = sphi 0, %s87
      %s102 = sphi 0, %s88
      %s106 = sphi 0, %s106
      %s108 = sphi 0, %s106
      %s109 = sphi 0, %s108
      %s123 = sphi 0, %s109
      %s127 = sphi 0, %s127
      %s129 = sphi 0, %s127
      %s130 = sphi 0, %s129
      %s144 = sphi 0, %s130
      %s148 = sphi 0, %s148
      %s150 = sphi 0, %s148
      %s151 = sphi 0, %s150
      %s165 = sphi 0, %s151
      %s169 = sphi 0, %s169
      %s171 = sphi 0, %s169
      %s172 = sphi 0, %s171
      %s186 = sphi 0, %s172
      %s190 = sphi 0, %s190
      %s192 = sphi 0, %s190
      %s193 = sphi 0, %s192
      %s207 = sphi 0, %s193
      %s211 = sphi 0, %s211
      %s213 = sphi 0, %s211
      %s214 = sphi 0, %s213
      %s228 = sphi 0, %s214
      %s232 = sphi 0, %s232
      %s234 = sphi 0, %s232
      %s235 = sphi 0, %s234
      %s249 = sphi 0, %s235
      %s253 = sphi 0, %s253
      %s255 = sphi 0, %s253
      %s256 = sphi 0, %s255
      %s270 = sphi 0, %s256
      %s274 = sphi 0, %s274
      %s276 = sphi 0, %s274
      %s277 = sphi 0, %s276
      %s291 = sphi 0, %s277
      %s297 = sphi 0, %s299
      %s300 = sphi 0, %s297
      %s301 = sphi 0, %s300
      %s317 = sphi 0, %s301
    $region4: #{tpu_custom_call.1} parent=1 // loop_header_branch
      %28 = sbr.rel (%p26) target = $region8
    $region5: #{tpu_custom_call.1} parent=1 // loop_body
      %s30 = ssub.s32 %s25, 1
      %s31 = ssub.s32 %s25, 2
      %s32 = sadd.s32 %s25, 1
      %s33 = ssub.s32 %s25, %s32
      %p34 = scmp.eq.s32.totalorder %s33, 0
      %s36 = sadd.s32 %s35, 1
      %s37 = scalar_select %p34, %s35, %s36
      %p40 = pneg %p34
      %p41 = scmp.eq.s32.totalorder %s25, 1
      %p42 = por %p40, %p41
      %p43 = scmp.ne.s32.totalorder %s35, %s38
      %p44 = scmp.eq.s32.totalorder %s25, 0
      %p45 = por %p43, %p44
      %p46 = scmp.ne.s32.totalorder %s35, %s38
      %p47 = scmp.eq.s32.totalorder %s30, 1
      %p48 = por %p46, %p47
      %p49 = scmp.ne.s32.totalorder %s38, %s39
      %p50 = scmp.eq.s32.totalorder %s30, 0
      %p51 = por %p49, %p50
      %p52 = scmp.ne.s32.totalorder %s38, %s39
      %p53 = scmp.eq.s32.totalorder %s31, 1
      %p54 = por %p52, %p53
      %p56 = scmp.ne.s32.totalorder %s39, %s55
      %p57 = scmp.eq.s32.totalorder %s31, 0
      %p58 = por %p56, %p57
      %s59 = ssub.s32 %s25, %s32
      %p60 = scmp.eq.s32.totalorder %s59, 0
      %s62 = sadd.s32 %s61, 1
      %s63 = scalar_select %p60, %s61, %s62
      %p66 = pneg %p60
      %p67 = scmp.eq.s32.totalorder %s25, 1
      %p68 = por %p66, %p67
      %p69 = scmp.ne.s32.totalorder %s61, %s64
      %p70 = scmp.eq.s32.totalorder %s25, 0
      %p71 = por %p69, %p70
      %p72 = scmp.ne.s32.totalorder %s61, %s64
      %p73 = scmp.eq.s32.totalorder %s30, 1
      %p74 = por %p72, %p73
      %p75 = scmp.ne.s32.totalorder %s64, %s65
      %p76 = scmp.eq.s32.totalorder %s30, 0
      %p77 = por %p75, %p76
      %p78 = scmp.ne.s32.totalorder %s64, %s65
      %p79 = scmp.eq.s32.totalorder %s31, 1
      %p80 = por %p78, %p79
      %p82 = scmp.ne.s32.totalorder %s65, %s81
      %p83 = scmp.eq.s32.totalorder %s31, 0
      %p84 = por %p82, %p83
      %s86 = sadd.s32 %s85, 1
      %p89 = scmp.eq.s32.totalorder %s25, 1
      %p90 = scmp.ne.s32.totalorder %s85, %s87
      %p91 = scmp.eq.s32.totalorder %s25, 0
      %p92 = por %p90, %p91
      %p93 = scmp.ne.s32.totalorder %s85, %s87
      %p94 = scmp.eq.s32.totalorder %s30, 1
      %p95 = por %p93, %p94
      %p96 = scmp.ne.s32.totalorder %s87, %s88
      %p97 = scmp.eq.s32.totalorder %s30, 0
      %p98 = por %p96, %p97
      %p99 = scmp.ne.s32.totalorder %s87, %s88
      %p100 = scmp.eq.s32.totalorder %s31, 1
      %p101 = por %p99, %p100
      %p103 = scmp.ne.s32.totalorder %s88, %s102
      %p104 = scmp.eq.s32.totalorder %s31, 0
      %p105 = por %p103, %p104
      %s107 = sadd.s32 %s106, 1
      %p110 = scmp.eq.s32.totalorder %s25, 1
      %p111 = scmp.ne.s32.totalorder %s106, %s108
      %p112 = scmp.eq.s32.totalorder %s25, 0
      %p113 = por %p111, %p112
      %p114 = scmp.ne.s32.totalorder %s106, %s108
      %p115 = scmp.eq.s32.totalorder %s30, 1
      %p116 = por %p114, %p115
      %p117 = scmp.ne.s32.totalorder %s108, %s109
      %p118 = scmp.eq.s32.totalorder %s30, 0
      %p119 = por %p117, %p118
      %p120 = scmp.ne.s32.totalorder %s108, %s109
      %p121 = scmp.eq.s32.totalorder %s31, 1
      %p122 = por %p120, %p121
      %p124 = scmp.ne.s32.totalorder %s109, %s123
      %p125 = scmp.eq.s32.totalorder %s31, 0
      %p126 = por %p124, %p125
      %s128 = sadd.s32 %s127, 1
      %p131 = scmp.eq.s32.totalorder %s25, 1
      %p132 = scmp.ne.s32.totalorder %s127, %s129
      %p133 = scmp.eq.s32.totalorder %s25, 0
      %p134 = por %p132, %p133
      %p135 = scmp.ne.s32.totalorder %s127, %s129
      %p136 = scmp.eq.s32.totalorder %s30, 1
      %p137 = por %p135, %p136
      %p138 = scmp.ne.s32.totalorder %s129, %s130
      %p139 = scmp.eq.s32.totalorder %s30, 0
      %p140 = por %p138, %p139
      %p141 = scmp.ne.s32.totalorder %s129, %s130
      %p142 = scmp.eq.s32.totalorder %s31, 1
      %p143 = por %p141, %p142
      %p145 = scmp.ne.s32.totalorder %s130, %s144
      %p146 = scmp.eq.s32.totalorder %s31, 0
      %p147 = por %p145, %p146
      %s149 = sadd.s32 %s148, 1
      %p152 = scmp.eq.s32.totalorder %s25, 1
      %p153 = scmp.ne.s32.totalorder %s148, %s150
      %p154 = scmp.eq.s32.totalorder %s25, 0
      %p155 = por %p153, %p154
      %p156 = scmp.ne.s32.totalorder %s148, %s150
      %p157 = scmp.eq.s32.totalorder %s30, 1
      %p158 = por %p156, %p157
      %p159 = scmp.ne.s32.totalorder %s150, %s151
      %p160 = scmp.eq.s32.totalorder %s30, 0
      %p161 = por %p159, %p160
      %p162 = scmp.ne.s32.totalorder %s150, %s151
      %p163 = scmp.eq.s32.totalorder %s31, 1
      %p164 = por %p162, %p163
      %p166 = scmp.ne.s32.totalorder %s151, %s165
      %p167 = scmp.eq.s32.totalorder %s31, 0
      %p168 = por %p166, %p167
      %s170 = sadd.s32 %s169, 1
      %p173 = scmp.eq.s32.totalorder %s25, 1
      %p174 = scmp.ne.s32.totalorder %s169, %s171
      %p175 = scmp.eq.s32.totalorder %s25, 0
      %p176 = por %p174, %p175
      %p177 = scmp.ne.s32.totalorder %s169, %s171
      %p178 = scmp.eq.s32.totalorder %s30, 1
      %p179 = por %p177, %p178
      %p180 = scmp.ne.s32.totalorder %s171, %s172
      %p181 = scmp.eq.s32.totalorder %s30, 0
      %p182 = por %p180, %p181
      %p183 = scmp.ne.s32.totalorder %s171, %s172
      %p184 = scmp.eq.s32.totalorder %s31, 1
      %p185 = por %p183, %p184
      %p187 = scmp.ne.s32.totalorder %s172, %s186
      %p188 = scmp.eq.s32.totalorder %s31, 0
      %p189 = por %p187, %p188
      %s191 = sadd.s32 %s190, 1
      %p194 = scmp.eq.s32.totalorder %s25, 1
      %p195 = scmp.ne.s32.totalorder %s190, %s192
      %p196 = scmp.eq.s32.totalorder %s25, 0
      %p197 = por %p195, %p196
      %p198 = scmp.ne.s32.totalorder %s190, %s192
      %p199 = scmp.eq.s32.totalorder %s30, 1
      %p200 = por %p198, %p199
      %p201 = scmp.ne.s32.totalorder %s192, %s193
      %p202 = scmp.eq.s32.totalorder %s30, 0
      %p203 = por %p201, %p202
      %p204 = scmp.ne.s32.totalorder %s192, %s193
      %p205 = scmp.eq.s32.totalorder %s31, 1
      %p206 = por %p204, %p205
      %p208 = scmp.ne.s32.totalorder %s193, %s207
      %p209 = scmp.eq.s32.totalorder %s31, 0
      %p210 = por %p208, %p209
      %s212 = sadd.s32 %s211, 1
      %p215 = scmp.eq.s32.totalorder %s25, 1
      %p216 = scmp.ne.s32.totalorder %s211, %s213
      %p217 = scmp.eq.s32.totalorder %s25, 0
      %p218 = por %p216, %p217
      %p219 = scmp.ne.s32.totalorder %s211, %s213
      %p220 = scmp.eq.s32.totalorder %s30, 1
      %p221 = por %p219, %p220
      %p222 = scmp.ne.s32.totalorder %s213, %s214
      %p223 = scmp.eq.s32.totalorder %s30, 0
      %p224 = por %p222, %p223
      %p225 = scmp.ne.s32.totalorder %s213, %s214
      %p226 = scmp.eq.s32.totalorder %s31, 1
      %p227 = por %p225, %p226
      %p229 = scmp.ne.s32.totalorder %s214, %s228
      %p230 = scmp.eq.s32.totalorder %s31, 0
      %p231 = por %p229, %p230
      %s233 = sadd.s32 %s232, 1
      %p236 = scmp.eq.s32.totalorder %s25, 1
      %p237 = scmp.ne.s32.totalorder %s232, %s234
      %p238 = scmp.eq.s32.totalorder %s25, 0
      %p239 = por %p237, %p238
      %p240 = scmp.ne.s32.totalorder %s232, %s234
      %p241 = scmp.eq.s32.totalorder %s30, 1
      %p242 = por %p240, %p241
      %p243 = scmp.ne.s32.totalorder %s234, %s235
      %p244 = scmp.eq.s32.totalorder %s30, 0
      %p245 = por %p243, %p244
      %p246 = scmp.ne.s32.totalorder %s234, %s235
      %p247 = scmp.eq.s32.totalorder %s31, 1
      %p248 = por %p246, %p247
      %p250 = scmp.ne.s32.totalorder %s235, %s249
      %p251 = scmp.eq.s32.totalorder %s31, 0
      %p252 = por %p250, %p251
      %s254 = sadd.s32 %s253, 1
      %p257 = scmp.eq.s32.totalorder %s25, 1
      %p258 = scmp.ne.s32.totalorder %s253, %s255
      %p259 = scmp.eq.s32.totalorder %s25, 0
      %p260 = por %p258, %p259
      %p261 = scmp.ne.s32.totalorder %s253, %s255
      %p262 = scmp.eq.s32.totalorder %s30, 1
      %p263 = por %p261, %p262
      %p264 = scmp.ne.s32.totalorder %s255, %s256
      %p265 = scmp.eq.s32.totalorder %s30, 0
      %p266 = por %p264, %p265
      %p267 = scmp.ne.s32.totalorder %s255, %s256
      %p268 = scmp.eq.s32.totalorder %s31, 1
      %p269 = por %p267, %p268
      %p271 = scmp.ne.s32.totalorder %s256, %s270
      %p272 = scmp.eq.s32.totalorder %s31, 0
      %p273 = por %p271, %p272
      %s275 = sadd.s32 %s274, 1
      %p278 = scmp.eq.s32.totalorder %s25, 1
      %p279 = scmp.ne.s32.totalorder %s274, %s276
      %p280 = scmp.eq.s32.totalorder %s25, 0
      %p281 = por %p279, %p280
      %p282 = scmp.ne.s32.totalorder %s274, %s276
      %p283 = scmp.eq.s32.totalorder %s30, 1
      %p284 = por %p282, %p283
      %p285 = scmp.ne.s32.totalorder %s276, %s277
      %p286 = scmp.eq.s32.totalorder %s30, 0
      %p287 = por %p285, %p286
      %p288 = scmp.ne.s32.totalorder %s276, %s277
      %p289 = scmp.eq.s32.totalorder %s31, 1
      %p290 = por %p288, %p289
      %p292 = scmp.ne.s32.totalorder %s277, %s291
      %p293 = scmp.eq.s32.totalorder %s31, 0
      %p294 = por %p292, %p293
      %s295 = ssub.s32 %s25, %s32
      %p296 = scmp.eq.s32.totalorder %s295, 0
      %s298 = sadd.s32 %s297, 1
      %s299 = scalar_select %p296, %s297, %s298
      %p302 = pneg %p296
      %p303 = scmp.eq.s32.totalorder %s25, 1
      %p304 = por %p302, %p303
      %p305 = scmp.ne.s32.totalorder %s297, %s300
      %p306 = scmp.eq.s32.totalorder %s25, 0
      %p307 = por %p305, %p306
      %p308 = scmp.ne.s32.totalorder %s297, %s300
      %p309 = scmp.eq.s32.totalorder %s30, 1
      %p310 = por %p308, %p309
      %p311 = scmp.ne.s32.totalorder %s300, %s301
      %p312 = scmp.eq.s32.totalorder %s30, 0
      %p313 = por %p311, %p312
      %p314 = scmp.ne.s32.totalorder %s300, %s301
      %p315 = scmp.eq.s32.totalorder %s31, 1
      %p316 = por %p314, %p315
      %p318 = scmp.ne.s32.totalorder %s301, %s317
      %p319 = scmp.eq.s32.totalorder %s31, 0
      %p320 = por %p318, %p319
      %p321 = scmp.le.s32.totalorder 1, %s25
      %p322 = scmp.lt.s32.totalorder %s25, 3
      %p323 = pnand %p321, %p322
      %p324 = pneg %p323
      // Predicated region
      $region9: #{tpu_custom_call.1} parent=5 // pred_check
        _
      $region10: #{tpu_custom_call.1} parent=5 // pred_check_branch
        %326 = sbr.rel (%p323) target = $region12
      $region11: #{tpu_custom_call.1} parent=5 // pred_region
        %s327 = ssub.s32 %s25, 1
        // Predicated region
        $region13: #{tpu_custom_call.1} parent=11 // pred_check
          %p328 = pneg %p98
        $region14: #{tpu_custom_call.1} parent=11 // pred_check_branch
          %330 = sbr.rel (%p328) target = $region16
        $region15: #{tpu_custom_call.1} parent=11 // pred_region
          _
        $region16: #{tpu_custom_call.1} parent=11 // pred_fallthru
          _
        // Predicated region
        $region17: #{tpu_custom_call.1} parent=11 // pred_check
          %p331 = pneg %p119
        $region18: #{tpu_custom_call.1} parent=11 // pred_check_branch
          %333 = sbr.rel (%p331) target = $region20
        $region19: #{tpu_custom_call.1} parent=11 // pred_region
          _
        $region20: #{tpu_custom_call.1} parent=11 // pred_fallthru
          _
        // Predicated region
        $region21: #{tpu_custom_call.1} parent=11 // pred_check
          %p334 = pneg %p140
        $region22: #{tpu_custom_call.1} parent=11 // pred_check_branch
          %336 = sbr.rel (%p334) target = $region24
        $region23: #{tpu_custom_call.1} parent=11 // pred_region
          _
        $region24: #{tpu_custom_call.1} parent=11 // pred_fallthru
          _
        // Predicated region
        $region25: #{tpu_custom_call.1} parent=11 // pred_check
          %p337 = pneg %p161
        $region26: #{tpu_custom_call.1} parent=11 // pred_check_branch
          %339 = sbr.rel (%p337) target = $region28
        $region27: #{tpu_custom_call.1} parent=11 // pred_region
          _
        $region28: #{tpu_custom_call.1} parent=11 // pred_fallthru
          _
        // Predicated region
        $region29: #{tpu_custom_call.1} parent=11 // pred_check
          %p340 = pneg %p182
        $region30: #{tpu_custom_call.1} parent=11 // pred_check_branch
          %342 = sbr.rel (%p340) target = $region32
        $region31: #{tpu_custom_call.1} parent=11 // pred_region
          _
        $region32: #{tpu_custom_call.1} parent=11 // pred_fallthru
          _
        // Predicated region
        $region33: #{tpu_custom_call.1} parent=11 // pred_check
          %p343 = pneg %p203
        $region34: #{tpu_custom_call.1} parent=11 // pred_check_branch
          %345 = sbr.rel (%p343) target = $region36
        $region35: #{tpu_custom_call.1} parent=11 // pred_region
          _
        $region36: #{tpu_custom_call.1} parent=11 // pred_fallthru
          _
        // Predicated region
        $region37: #{tpu_custom_call.1} parent=11 // pred_check
          %p346 = pneg %p224
        $region38: #{tpu_custom_call.1} parent=11 // pred_check_branch
          %348 = sbr.rel (%p346) target = $region40
        $region39: #{tpu_custom_call.1} parent=11 // pred_region
          %350 = vsyncadd [#allocation6], 0
          %s351 = sshll.u32 %s8, 4
          %s352 = int_to_ptr.hbm [resolvable:$true] %s351
          %s353 = sshll.u32 [#allocation5], 4
          %s354 = int_to_ptr.vmem [resolvable:$true] %s353
          %359 = dma.hbm_to_vmem [thread:$0]  %s352, 256, %s354, [#allocation6], 64, 64, 4
        $region40: #{tpu_custom_call.1} parent=11 // pred_fallthru
          _
        // Predicated region
        $region41: #{tpu_custom_call.1} parent=11 // pred_check
          %p360 = pneg %p245
        $region42: #{tpu_custom_call.1} parent=11 // pred_check_branch
          %362 = sbr.rel (%p360) target = $region44
        $region43: #{tpu_custom_call.1} parent=11 // pred_region
          _
        $region44: #{tpu_custom_call.1} parent=11 // pred_fallthru
          _
        // Predicated region
        $region45: #{tpu_custom_call.1} parent=11 // pred_check
          %p363 = pneg %p266
        $region46: #{tpu_custom_call.1} parent=11 // pred_check_branch
          %365 = sbr.rel (%p363) target = $region48
        $region47: #{tpu_custom_call.1} parent=11 // pred_region
          _
        $region48: #{tpu_custom_call.1} parent=11 // pred_fallthru
          _
        // Predicated region
        $region49: #{tpu_custom_call.1} parent=11 // pred_check
          %p366 = pneg %p287
        $region50: #{tpu_custom_call.1} parent=11 // pred_check_branch
          %368 = sbr.rel (%p366) target = $region52
        $region51: #{tpu_custom_call.1} parent=11 // pred_region
          _
        $region52: #{tpu_custom_call.1} parent=11 // pred_fallthru
          _
      $region12: #{tpu_custom_call.1} parent=5 // pred_fallthru
        _
      %p369 = scmp.lt.s32.totalorder %s25, 2
      // Predicated region
      $region53: #{tpu_custom_call.1} parent=5 // pred_check
        %p370 = pneg %p369
      $region54: #{tpu_custom_call.1} parent=5 // pred_check_branch
        %372 = sbr.rel (%p370) target = $region56
      $region55: #{tpu_custom_call.1} parent=5 // pred_region
        // Predicated region
        $region57: #{tpu_custom_call.1} parent=55 // pred_check
          %p373 = pneg %p45
        $region58: #{tpu_custom_call.1} parent=55 // pred_check_branch
          %375 = sbr.rel (%p373) target = $region60
        $region59: #{tpu_custom_call.1} parent=55 // pred_region
          %p376 = scmp.lt.s32.totalorder %s25, 1
          %s377 = scalar_select %p376, %s25, 1
          %s378 = smul.addr %s377, 8
          %s379 = scalar_lea.vmem %s0, %s378
        $region60: #{tpu_custom_call.1} parent=55 // pred_fallthru
          _
        // Predicated region
        $region61: #{tpu_custom_call.1} parent=55 // pred_check
          %p380 = pneg %p71
        $region62: #{tpu_custom_call.1} parent=55 // pred_check_branch
          %382 = sbr.rel (%p380) target = $region64
        $region63: #{tpu_custom_call.1} parent=55 // pred_region
          %s383 = sand.u32 %s61, 1
          %s384 = scalar_lea.sflag [#allocation3], %s383
          %s385 = sand.u32 %s61, 1
          %s386 = scalar_lea.vmem [#allocation2], %s385
          %388 = vsyncadd %s384, 0
          %s389 = scalar_lea.hbm %s1, %s25
          %s391 = sshll.u32 %s389, 4
          %s392 = int_to_ptr.hbm [resolvable:$true] %s391
          %s393 = sshll.u32 %s386, 4
          %s394 = int_to_ptr.vmem [resolvable:$true] %s393
          %396 = dma.hbm_to_vmem [thread:$0]  %s392, 16, %s394, %s384
        $region64: #{tpu_custom_call.1} parent=55 // pred_fallthru
          _
      $region56: #{tpu_custom_call.1} parent=5 // pred_fallthru
        _
      %p397 = scmp.le.s32.totalorder 1, %s25
      %p398 = scmp.lt.s32.totalorder %s25, 3
      %p399 = pnand %p397, %p398
      %p400 = pneg %p399
      // Predicated region
      $region65: #{tpu_custom_call.1} parent=5 // pred_check
        _
      $region66: #{tpu_custom_call.1} parent=5 // pred_check_branch
        %402 = sbr.rel (%p399) target = $region68
      $region67: #{tpu_custom_call.1} parent=5 // pred_region
        %s403 = ssub.s32 %s25, 1
        %s404 = sand.u32 %s64, 1
        %s405 = scalar_lea.sflag [#allocation3], %s404
        %s406 = sand.u32 %s64, 1
        %s407 = scalar_lea.vmem [#allocation2], %s406
        // Predicated region
        $region69: #{tpu_custom_call.1} parent=67 // pred_check
          %p408 = pneg %p77
        $region70: #{tpu_custom_call.1} parent=67 // pred_check_branch
          %410 = sbr.rel (%p408) target = $region72
        $region71: #{tpu_custom_call.1} parent=67 // pred_region
          %412 = dma.done %s405, 16
        $region72: #{tpu_custom_call.1} parent=67 // pred_fallthru
          _
        // Predicated region
        $region73: #{tpu_custom_call.1} parent=67 // pred_check
          %p413 = pneg %p224
        $region74: #{tpu_custom_call.1} parent=67 // pred_check_branch
          %415 = sbr.rel (%p413) target = $region76
        $region75: #{tpu_custom_call.1} parent=67 // pred_region
          %417 = dma.done [#allocation6], 256
        $region76: #{tpu_custom_call.1} parent=67 // pred_fallthru
          _
        %p418 = scmp.lt.s32.totalorder %s30, 1
        %s419 = scalar_select %p418, %s30, 1
        %s420 = smul.addr %s419, 8
        %s421 = scalar_lea.vmem %s0, %s420
        %p422 = pneg %p51
        %p423 = pneg %p48
        %s424 = sand.u32 %s64, 1
        %s425 = scalar_lea.sflag [#allocation3], %s424
        %s426 = sand.u32 %s64, 1
        %s427 = scalar_lea.vmem [#allocation2], %s426
        %p428 = pneg %p77
        %p429 = pneg %p74
        %p430 = pneg %p98
        %p431 = pneg %p95
        %p432 = pneg %p119
        %p433 = pneg %p116
        %p434 = pneg %p140
        %p435 = pneg %p137
        %p436 = pneg %p161
        %p437 = pneg %p158
        %p438 = pneg %p182
        %p439 = pneg %p179
        %p440 = pneg %p203
        %p441 = pneg %p200
        %p442 = pneg %p224
        %p443 = pneg %p221
        %p444 = pneg %p245
        %p445 = pneg %p242
        %p446 = pneg %p266
        %p447 = pneg %p263
        %p448 = pneg %p287
        %p449 = pneg %p284
        %p450 = pneg %p313
        %p451 = pneg %p310
        %s452 = sand.u32 %s300, 1
        %s453 = scalar_lea.sflag [#allocation4], %s452
        %s454 = sand.u32 %s300, 1
        %s455 = smul.addr %s454, 8
        %s456 = scalar_lea.vmem [#allocation7], %s455
        %p457 = scmp.lt.s32.totalorder %s30, 1
        %s458 = scalar_select %p457, %s30, 1
        %s459 = smul.addr %s458, 8
        %s460 = scalar_lea.vmem %s0, %s459
        %v462 = vld [vmem:[%s460] sm:$0xff]
        %v463 = vld [vmem:[%s407] sm:$0x1]
        %v464 = vld [vmem:[%s2] sm:$0x1]
        %v465 = vld [vmem:[%s3] sm:$0x1]
        %vm466 = vcmask 261120
        %v467 = vsel %vm466, %v462, 0.0
        %468 = vadd.xlane.f32.xlu0 %v467
        %v469 = vpop.xlane.xlu0 %468
        %v470 = vrcp.pop 32.0
        %v471 = vmul.f32 32.0, %v470
        %v472 = vsub.f32 1.0, %v471
        %v473 = vmul.f32 %v470, %v472
        %v474 = vadd.f32 %v470, %v473
        %vm475 = vweird.f32 %v470
        %v476 = vsel %vm475, %v470, %v474
        %v477 = vmul.f32 %v469, %v476
        %v478 = vsub.f32 %v462, %v477
        %v479 = vmul.f32 %v478, %v478
        %v480 = vsel %vm466, %v479, 0.0
        %481 = vadd.xlane.f32.xlu0 %v480
        %v482 = vpop.xlane.xlu0 %481
        %v483 = vmul.f32 %v482, %v476
        %v484 = vadd.f32 %v483, 1e-05
        %v485 = vrsqrt.pop %v484
        %v486 = vmul.f32 %v485, %v484
        %v487 = vmul.f32 %v486, %v485
        %v488 = vmul.f32 0.5, %v487
        %v489 = vsub.f32 1.5, %v488
        %v490 = vmul.f32 %v485, %v489
        %vm491 = vweird.f32 %v484
        %vm492 = vweird.f32 %v485
        %vm493 = vmor %vm491, %vm492
        %v494 = vsel %vm493, %v485, %v490
        %v495 = vmul.f32 %v478, %v494
        %v497 = vperm.slane %v464, 0
        %v499 = vmul.f32 %v495, %v497
        %v501 = vperm.slane %v465, 0
        %v503 = vadd.f32 %v499, %v501
        %v504 = vpack.c.bf16 %v503, %v503
        %v505 = vld [vmem:[%s4] sm:$0xf]
        %v506 = vld [vmem:[%s4 + $0x4] sm:$0xf]
        %v507 = vld [vmem:[%s4 + $0x8] sm:$0xf]
        %v508 = vld [vmem:[%s4 + $0xc] sm:$0xf]
        %v513 = vunpack.c.l.b16 %v505
        %v514 = vunpack.c.l.b16 %v506
        %v515 = vunpack.c.l.b16 %v507
        %v516 = vunpack.c.l.b16 %v508
        %v517 = vpack.c.b16 %v514, %v513
        %v518 = vpack.c.b16 %v516, %v515
        %v522 = vsel %vm466, %v504, 0
        %524 = vmatpush.bf16.msra.mxu0 0
        %525 = vmatpush.bf16.msra.mxu0 0
        %526 = vmatpush.bf16.msra.mxu0 0
        %527 = vmatpush.bf16.msra.mxu0 0
        %528 = vmatpush.bf16.msra.mxu0 0
        %529 = vmatpush.bf16.msra.mxu0 0
        %530 = vmatpush.bf16.msra.mxu0 %v518
        %531 = vmatpush.bf16.msra.mxu0 %v517
        %532 = vmatmul.bf16.gmra.mxu0 %v522
        %v533 = vpop.f32.mrf.mxu0
        %v534 = vadd.f32 0.0, %v533
        %v535 = vpop.f32.mrf.mxu0
        %536 = vdwg.mxu0
        %v537 = vmul.f32 %v534, 0.35355338
        %v538 = vpack.c.bf16 %v537, %v537
        %v539 = vpack.c.bf16 %v534, %v534
        %v540 = vsub.f32 %v463, 1.0
        %v541 = vmul.f32 %v540, 1e+30
        %v542 = vld [vmem:[%s5] sm:$0xf]
        %v543 = vld [vmem:[%s5 + $0x4] sm:$0xf]
        %v544 = vld [vmem:[%s5 + $0x8] sm:$0xf]
        %v545 = vld [vmem:[%s5 + $0xc] sm:$0xf]
        %v547 = vperm.slane %v541, 0
        %v550 = vunpack.c.l.b16 %v539
        %v551 = vpack.c.b16 %v550, %v550
        %552 = vrot.lane.b32.xlu0 %v551, 96
        %v553 = vpop.permute.xlu0 %552
        %vm554 = vcmask 64512
        %v556 = vsel %vm554, %v538, 0
        %v559 = vsel %vm554, %v553, 0
        %561 = vmatpush.bf16.xpose.msra.mxu0 0
        %562 = vmatpush.bf16.xpose.msra.mxu0 0
        %563 = vmatpush.bf16.xpose.msra.mxu0 0
        %564 = vmatpush.bf16.xpose.msra.mxu0 0
        %565 = vmatpush.bf16.xpose.msra.mxu0 0
        %566 = vmatpush.bf16.xpose.msra.mxu0 0
        %567 = vmatpush.bf16.xpose.msra.mxu0 0
        %568 = vmatpush.bf16.xpose.msra.mxu0 %v559
        %569 = vmatmul.bf16.gmra.mxu0 %v556
        %v570 = vpop.f32.mrf.mxu0
        %v571 = vadd.f32 %v547, %v570
        %v572 = vpop.f32.mrf.mxu0
        %573 = vdwg.mxu0
        %v574 = vsel %vm554, %v571, -inf
        %575 = vmax.xlane.f32.xlu0 %v574
        %v576 = vpop.xlane.xlu0 %575
        %v577 = vsub.f32 %v571, %v576
        %v578 = vmul.f32 %v577, 1.442695
        %v579 = vpow.pop %v578
        %v580 = vsel %vm554, %v579, 0.0
        %581 = vadd.xlane.f32.xlu0 %v580
        %v582 = vpop.xlane.xlu0 %581
        %v583 = vrcp.pop %v582
        %v584 = vmul.f32 %v579, %v583
        %v585 = vpack.c.bf16 %v584, %v584
        %586 = vrot.lane.b32.xlu0 %v551, 64
        %v587 = vpop.permute.xlu0 %586
        %v589 = vsel %vm554, %v585, 0
        %vm591 = vcmask 1043456
        %v593 = vsel %vm591, %v587, 0
        %595 = vmatpush.bf16.msra.mxu0 0
        %596 = vmatpush.bf16.msra.mxu0 0
        %597 = vmatpush.bf16.msra.mxu0 0
        %598 = vmatpush.bf16.msra.mxu0 0
        %599 = vmatpush.bf16.msra.mxu0 0
        %600 = vmatpush.bf16.msra.mxu0 0
        %601 = vmatpush.bf16.msra.mxu0 0
        %602 = vmatpush.bf16.msra.mxu0 %v593
        %603 = vmatmul.bf16.gmra.mxu0 %v589
        %v604 = vpop.f32.mrf.mxu0
        %v605 = vadd.f32 0.0, %v604
        %v606 = vpop.f32.mrf.mxu0
        %607 = vdwg.mxu0
        %v608 = vpack.c.bf16 %v605, %v605
        %v610 = vunpack.c.l.b16 %v538
        %v611 = vpack.c.b16 %v610, %v610
        %612 = vrot.lane.b32.xlu0 %v611, 120
        %v613 = vpop.permute.xlu0 %612
        %614 = vrot.lane.b32.xlu0 %v551, 88
        %v615 = vpop.permute.xlu0 %614
        %v617 = vsel %vm554, %v613, 0
        %v620 = vsel %vm554, %v615, 0
        %622 = vmatpush.bf16.xpose.msra.mxu0 0
        %623 = vmatpush.bf16.xpose.msra.mxu0 0
        %624 = vmatpush.bf16.xpose.msra.mxu0 0
        %625 = vmatpush.bf16.xpose.msra.mxu0 0
        %626 = vmatpush.bf16.xpose.msra.mxu0 0
        %627 = vmatpush.bf16.xpose.msra.mxu0 0
        %628 = vmatpush.bf16.xpose.msra.mxu0 0
        %629 = vmatpush.bf16.xpose.msra.mxu0 %v620
        %630 = vmatmul.bf16.gmra.mxu0 %v617
        %v631 = vpop.f32.mrf.mxu0
        %v632 = vadd.f32 %v547, %v631
        %v633 = vpop.f32.mrf.mxu0
        %634 = vdwg.mxu0
        %v635 = vsel %vm554, %v632, -inf
        %636 = vmax.xlane.f32.xlu0 %v635
        %v637 = vpop.xlane.xlu0 %636
        %v638 = vsub.f32 %v632, %v637
        %v639 = vmul.f32 %v638, 1.442695
        %v640 = vpow.pop %v639
        %v641 = vsel %vm554, %v640, 0.0
        %642 = vadd.xlane.f32.xlu0 %v641
        %v643 = vpop.xlane.xlu0 %642
        %v644 = vrcp.pop %v643
        %v645 = vmul.f32 %v640, %v644
        %v646 = vpack.c.bf16 %v645, %v645
        %647 = vrot.lane.b32.xlu0 %v551, 56
        %v648 = vpop.permute.xlu0 %647
        %v650 = vsel %vm554, %v646, 0
        %v653 = vsel %vm591, %v648, 0
        %655 = vmatpush.bf16.msra.mxu0 0
        %656 = vmatpush.bf16.msra.mxu0 0
        %657 = vmatpush.bf16.msra.mxu0 0
        %658 = vmatpush.bf16.msra.mxu0 0
        %659 = vmatpush.bf16.msra.mxu0 0
        %660 = vmatpush.bf16.msra.mxu0 0
        %661 = vmatpush.bf16.msra.mxu0 0
        %662 = vmatpush.bf16.msra.mxu0 %v653
        %663 = vmatmul.bf16.gmra.mxu0 %v650
        %v664 = vpop.f32.mrf.mxu0
        %v665 = vadd.f32 0.0, %v664
        %v666 = vpop.f32.mrf.mxu0
        %667 = vdwg.mxu0
        %v668 = vpack.c.bf16 %v665, %v665
        %v670 = vsel %vm554, %v668, 0
        %v673 = vsel %vm591, %v543, 0
        %675 = vmatpush.bf16.msra.mxu0 0
        %676 = vmatpush.bf16.msra.mxu0 0
        %677 = vmatpush.bf16.msra.mxu0 0
        %678 = vmatpush.bf16.msra.mxu0 0
        %679 = vmatpush.bf16.msra.mxu0 0
        %680 = vmatpush.bf16.msra.mxu0 0
        %681 = vmatpush.bf16.msra.mxu0 0
        %682 = vmatpush.bf16.msra.mxu0 %v673
        %683 = vmatmul.bf16.gmra.mxu0 %v670
        %v684 = vpop.f32.mrf.mxu0
        %v685 = vadd.f32 0.0, %v684
        %v686 = vpop.f32.mrf.mxu0
        %687 = vdwg.mxu0
        %v689 = vsel %vm554, %v608, 0
        %v692 = vsel %vm591, %v542, 0
        %694 = vmatpush.bf16.msra.mxu0 0
        %695 = vmatpush.bf16.msra.mxu0 0
        %696 = vmatpush.bf16.msra.mxu0 0
        %697 = vmatpush.bf16.msra.mxu0 0
        %698 = vmatpush.bf16.msra.mxu0 0
        %699 = vmatpush.bf16.msra.mxu0 0
        %700 = vmatpush.bf16.msra.mxu0 0
        %701 = vmatpush.bf16.msra.mxu0 %v692
        %702 = vmatmul.bf16.gmra.mxu0 %v689
        %v703 = vpop.f32.mrf.mxu0
        %v704 = vadd.f32 %v685, %v703
        %v705 = vpop.f32.mrf.mxu0
        %706 = vdwg.mxu0
        %707 = vrot.lane.b32.xlu0 %v611, 112
        %v708 = vpop.permute.xlu0 %707
        %709 = vrot.lane.b32.xlu0 %v551, 80
        %v710 = vpop.permute.xlu0 %709
        %v712 = vsel %vm554, %v708, 0
        %v715 = vsel %vm554, %v710, 0
        %717 = vmatpush.bf16.xpose.msra.mxu0 0
        %718 = vmatpush.bf16.xpose.msra.mxu0 0
        %719 = vmatpush.bf16.xpose.msra.mxu0 0
        %720 = vmatpush.bf16.xpose.msra.mxu0 0
        %721 = vmatpush.bf16.xpose.msra.mxu0 0
        %722 = vmatpush.bf16.xpose.msra.mxu0 0
        %723 = vmatpush.bf16.xpose.msra.mxu0 0
        %724 = vmatpush.bf16.xpose.msra.mxu0 %v715
        %725 = vmatmul.bf16.gmra.mxu0 %v712
        %v726 = vpop.f32.mrf.mxu0
        %v727 = vadd.f32 %v547, %v726
        %v728 = vpop.f32.mrf.mxu0
        %729 = vdwg.mxu0
        %v730 = vsel %vm554, %v727, -inf
        %731 = vmax.xlane.f32.xlu0 %v730
        %v732 = vpop.xlane.xlu0 %731
        %v733 = vsub.f32 %v727, %v732
        %v734 = vmul.f32 %v733, 1.442695
        %v735 = vpow.pop %v734
        %v736 = vsel %vm554, %v735, 0.0
        %737 = vadd.xlane.f32.xlu0 %v736
        %v738 = vpop.xlane.xlu0 %737
        %v739 = vrcp.pop %v738
        %v740 = vmul.f32 %v735, %v739
        %v741 = vpack.c.bf16 %v740, %v740
        %742 = vrot.lane.b32.xlu0 %v551, 48
        %v743 = vpop.permute.xlu0 %742
        %v745 = vsel %vm554, %v741, 0
        %v748 = vsel %vm591, %v743, 0
        %750 = vmatpush.bf16.msra.mxu0 0
        %751 = vmatpush.bf16.msra.mxu0 0
        %752 = vmatpush.bf16.msra.mxu0 0
        %753 = vmatpush.bf16.msra.mxu0 0
        %754 = vmatpush.bf16.msra.mxu0 0
        %755 = vmatpush.bf16.msra.mxu0 0
        %756 = vmatpush.bf16.msra.mxu0 0
        %757 = vmatpush.bf16.msra.mxu0 %v748
        %758 = vmatmul.bf16.gmra.mxu0 %v745
        %v759 = vpop.f32.mrf.mxu0
        %v760 = vadd.f32 0.0, %v759
        %v761 = vpop.f32.mrf.mxu0
        %762 = vdwg.mxu0
        %v763 = vpack.c.bf16 %v760, %v760
        %v765 = vsel %vm554, %v763, 0
        %v768 = vsel %vm591, %v544, 0
        %770 = vmatpush.bf16.msra.mxu0 0
        %771 = vmatpush.bf16.msra.mxu0 0
        %772 = vmatpush.bf16.msra.mxu0 0
        %773 = vmatpush.bf16.msra.mxu0 0
        %774 = vmatpush.bf16.msra.mxu0 0
        %775 = vmatpush.bf16.msra.mxu0 0
        %776 = vmatpush.bf16.msra.mxu0 0
        %777 = vmatpush.bf16.msra.mxu0 %v768
        %778 = vmatmul.bf16.gmra.mxu0 %v765
        %v779 = vpop.f32.mrf.mxu0
        %v780 = vadd.f32 0.0, %v779
        %v781 = vpop.f32.mrf.mxu0
        %782 = vdwg.mxu0
        %v783 = vadd.f32 %v704, %v780
        %784 = vrot.lane.b32.xlu0 %v611, 104
        %v785 = vpop.permute.xlu0 %784
        %786 = vrot.lane.b32.xlu0 %v551, 72
        %v787 = vpop.permute.xlu0 %786
        %v789 = vsel %vm554, %v785, 0
        %v792 = vsel %vm554, %v787, 0
        %794 = vmatpush.bf16.xpose.msra.mxu0 0
        %795 = vmatpush.bf16.xpose.msra.mxu0 0
        %796 = vmatpush.bf16.xpose.msra.mxu0 0
        %797 = vmatpush.bf16.xpose.msra.mxu0 0
        %798 = vmatpush.bf16.xpose.msra.mxu0 0
        %799 = vmatpush.bf16.xpose.msra.mxu0 0
        %800 = vmatpush.bf16.xpose.msra.mxu0 0
        %801 = vmatpush.bf16.xpose.msra.mxu0 %v792
        %802 = vmatmul.bf16.gmra.mxu0 %v789
        %v803 = vpop.f32.mrf.mxu0
        %v804 = vadd.f32 %v547, %v803
        %v805 = vpop.f32.mrf.mxu0
        %806 = vdwg.mxu0
        %v807 = vsel %vm554, %v804, -inf
        %808 = vmax.xlane.f32.xlu0 %v807
        %v809 = vpop.xlane.xlu0 %808
        %v810 = vsub.f32 %v804, %v809
        %v811 = vmul.f32 %v810, 1.442695
        %v812 = vpow.pop %v811
        %v813 = vsel %vm554, %v812, 0.0
        %814 = vadd.xlane.f32.xlu0 %v813
        %v815 = vpop.xlane.xlu0 %814
        %v816 = vrcp.pop %v815
        %v817 = vmul.f32 %v812, %v816
        %v818 = vpack.c.bf16 %v817, %v817
        %819 = vrot.lane.b32.xlu0 %v551, 40
        %v820 = vpop.permute.xlu0 %819
        %v822 = vsel %vm554, %v818, 0
        %v825 = vsel %vm591, %v820, 0
        %827 = vmatpush.bf16.msra.mxu0 0
        %828 = vmatpush.bf16.msra.mxu0 0
        %829 = vmatpush.bf16.msra.mxu0 0
        %830 = vmatpush.bf16.msra.mxu0 0
        %831 = vmatpush.bf16.msra.mxu0 0
        %832 = vmatpush.bf16.msra.mxu0 0
        %833 = vmatpush.bf16.msra.mxu0 0
        %834 = vmatpush.bf16.msra.mxu0 %v825
        %835 = vmatmul.bf16.gmra.mxu0 %v822
        %v836 = vpop.f32.mrf.mxu0
        %v837 = vadd.f32 0.0, %v836
        %v838 = vpop.f32.mrf.mxu0
        %839 = vdwg.mxu0
        %v840 = vpack.c.bf16 %v837, %v837
        %v842 = vsel %vm554, %v840, 0
        %v845 = vsel %vm591, %v545, 0
        %847 = vmatpush.bf16.msra.mxu0 0
        %848 = vmatpush.bf16.msra.mxu0 0
        %849 = vmatpush.bf16.msra.mxu0 0
        %850 = vmatpush.bf16.msra.mxu0 0
        %851 = vmatpush.bf16.msra.mxu0 0
        %852 = vmatpush.bf16.msra.mxu0 0
        %853 = vmatpush.bf16.msra.mxu0 0
        %854 = vmatpush.bf16.msra.mxu0 %v845
        %855 = vmatmul.bf16.gmra.mxu0 %v842
        %v856 = vpop.f32.mrf.mxu0
        %v857 = vadd.f32 0.0, %v856
        %v858 = vpop.f32.mrf.mxu0
        %859 = vdwg.mxu0
        %v860 = vadd.f32 %v783, %v857
        %v861 = vadd.f32 %v503, %v860
        %v862 = vld [vmem:[%s6] sm:$0x1]
        %v863 = vld [vmem:[%s7] sm:$0x1]
        %v864 = vsel %vm466, %v861, 0.0
        %865 = vadd.xlane.f32.xlu0 %v864
        %v866 = vpop.xlane.xlu0 %865
        %v867 = vmul.f32 %v866, %v476
        %v868 = vsub.f32 %v861, %v867
        %v869 = vmul.f32 %v868, %v868
        %v870 = vsel %vm466, %v869, 0.0
        %871 = vadd.xlane.f32.xlu0 %v870
        %v872 = vpop.xlane.xlu0 %871
        %v873 = vmul.f32 %v872, %v476
        %v874 = vadd.f32 %v873, 1e-05
        %v875 = vrsqrt.pop %v874
        %v876 = vmul.f32 %v875, %v874
        %v877 = vmul.f32 %v876, %v875
        %v878 = vmul.f32 0.5, %v877
        %v879 = vsub.f32 1.5, %v878
        %v880 = vmul.f32 %v875, %v879
        %vm881 = vweird.f32 %v874
        %vm882 = vweird.f32 %v875
        %vm883 = vmor %vm881, %vm882
        %v884 = vsel %vm883, %v875, %v880
        %v885 = vmul.f32 %v868, %v884
        %v887 = vperm.slane %v862, 0
        %v889 = vmul.f32 %v885, %v887
        %v891 = vperm.slane %v863, 0
        %v893 = vadd.f32 %v889, %v891
        %v894 = vpack.c.bf16 %v893, %v893
        %v895 = vld [vmem:[#allocation5] sm:$0xf]
        %v896 = vld [vmem:[#allocation5 + $0x4] sm:$0xf]
        %v897 = vld [vmem:[#allocation5 + $0x8] sm:$0xf]
        %v898 = vld [vmem:[#allocation5 + $0xc] sm:$0xf]
        %v899 = vld [vmem:[%s9] sm:$0x1]
        %v901 = vperm.slane %v899, 0
        %v907 = vunpack.c.l.b16 %v895
        %v908 = vunpack.c.l.b16 %v896
        %v909 = vunpack.c.l.b16 %v897
        %v910 = vunpack.c.l.b16 %v898
        %v911 = vpack.c.b16 %v908, %v907
        %v912 = vpack.c.b16 %v910, %v909
        %v916 = vsel %vm466, %v894, 0
        %918 = vmatpush.bf16.msra.mxu0 0
        %919 = vmatpush.bf16.msra.mxu0 0
        %920 = vmatpush.bf16.msra.mxu0 0
        %921 = vmatpush.bf16.msra.mxu0 0
        %922 = vmatpush.bf16.msra.mxu0 0
        %923 = vmatpush.bf16.msra.mxu0 0
        %924 = vmatpush.bf16.msra.mxu0 %v912
        %925 = vmatpush.bf16.msra.mxu0 %v911
        %926 = vmatmul.bf16.gmra.mxu0 %v916
        %v927 = vpop.f32.mrf.mxu0
        %v928 = vadd.f32 %v901, %v927
        %v929 = vpop.f32.mrf.mxu0
        %930 = vdwg.mxu0
        %v931 = vmax.f32 %v928, 0.0
        %v932 = vpack.c.bf16 %v931, %v931
        %v933 = vld [vmem:[%s10] sm:$0xf]
        %v934 = vld [vmem:[%s10 + $0x4] sm:$0xf]
        %v935 = vld [vmem:[%s10 + $0x8] sm:$0xf]
        %v936 = vld [vmem:[%s10 + $0xc] sm:$0xf]
        %v937 = vld [vmem:[%s10 + $0x10] sm:$0xf]
        %v938 = vld [vmem:[%s10 + $0x14] sm:$0xf]
        %v939 = vld [vmem:[%s10 + $0x18] sm:$0xf]
        %v940 = vld [vmem:[%s10 + $0x1c] sm:$0xf]
        %v941 = vld [vmem:[%s11] sm:$0x1]
        %v943 = vperm.slane %v941, 0
        %v953 = vunpack.c.l.b16 %v933
        %v954 = vunpack.c.l.b16 %v934
        %v955 = vunpack.c.l.b16 %v935
        %v956 = vunpack.c.l.b16 %v936
        %v957 = vunpack.c.l.b16 %v937
        %v958 = vunpack.c.l.b16 %v938
        %v959 = vunpack.c.l.b16 %v939
        %v960 = vunpack.c.l.b16 %v940
        %v961 = vpack.c.b16 %v954, %v953
        %v962 = vpack.c.b16 %v956, %v955
        %v963 = vpack.c.b16 %v958, %v957
        %v964 = vpack.c.b16 %v960, %v959
        %vm969 = vcmask 523264
        %v971 = vsel %vm969, %v932, 0
        %973 = vmatpush.bf16.msra.mxu0 0
        %974 = vmatpush.bf16.msra.mxu0 0
        %975 = vmatpush.bf16.msra.mxu0 0
        %976 = vmatpush.bf16.msra.mxu0 0
        %977 = vmatpush.bf16.msra.mxu0 %v964
        %978 = vmatpush.bf16.msra.mxu0 %v963
        %979 = vmatpush.bf16.msra.mxu0 %v962
        %980 = vmatpush.bf16.msra.mxu0 %v961
        %981 = vmatmul.bf16.gmra.mxu0 %v971
        %v982 = vpop.f32.mrf.mxu0
        %v983 = vadd.f32 %v943, %v982
        %v984 = vpop.f32.mrf.mxu0
        %985 = vdwg.mxu0
        %v986 = vadd.f32 %v861, %v983
        %987 = vst.msk [vmem:[%s456] sm:$0xff] %vm466, %v986
        %s988 = sand.u32 %s300, 1
        %s989 = scalar_lea.sflag [#allocation4], %s988
        %s990 = sand.u32 %s300, 1
        %s991 = smul.addr %s990, 8
        %s992 = scalar_lea.vmem [#allocation7], %s991
        // Predicated region
        $region77: #{tpu_custom_call.1} parent=67 // pred_check
          %p993 = pneg %p310
        $region78: #{tpu_custom_call.1} parent=67 // pred_check_branch
          %995 = sbr.rel (%p993) target = $region80
        $region79: #{tpu_custom_call.1} parent=67 // pred_region
          %997 = vsyncadd %s989, 0
          %s998 = smul.addr %s30, 8
          %s999 = scalar_lea.hbm %s12, %s998
          %s1001 = sshll.u32 %s992, 4
          %s1002 = int_to_ptr.vmem [resolvable:$true] %s1001
          %s1003 = sshll.u32 %s999, 4
          %s1004 = int_to_ptr.hbm [resolvable:$true] %s1003
          %1006 = dma.vmem_to_hbm [thread:$0]  %s1002, 128, %s1004, %s989
        $region80: #{tpu_custom_call.1} parent=67 // pred_fallthru
          _
      $region68: #{tpu_custom_call.1} parent=5 // pred_fallthru
        _
      %p1007 = scmp.le.s32.totalorder 2, %s25
      // Predicated region
      $region81: #{tpu_custom_call.1} parent=5 // pred_check
        %p1008 = pneg %p1007
      $region82: #{tpu_custom_call.1} parent=5 // pred_check_branch
        %1010 = sbr.rel (%p1008) target = $region84
      $region83: #{tpu_custom_call.1} parent=5 // pred_region
        %s1011 = ssub.s32 %s25, 2
        // Predicated region
        $region85: #{tpu_custom_call.1} parent=83 // pred_check
          %p1012 = pneg %p316
        $region86: #{tpu_custom_call.1} parent=83 // pred_check_branch
          %1014 = sbr.rel (%p1012) target = $region88
        $region87: #{tpu_custom_call.1} parent=83 // pred_region
          %s1015 = sand.u32 %s301, 1
          %s1016 = scalar_lea.sflag [#allocation4], %s1015
          %s1017 = sand.u32 %s301, 1
          %s1018 = smul.addr %s1017, 8
          %s1019 = scalar_lea.vmem [#allocation7], %s1018
          %1021 = dma.done %s1016, 128
        $region88: #{tpu_custom_call.1} parent=83 // pred_fallthru
          _
      $region84: #{tpu_custom_call.1} parent=5 // pred_fallthru
        _
    $region6: #{tpu_custom_call.1} parent=1 // loop_footer
      %s29 = sadd.s32 1, %s25
    $region7: #{tpu_custom_call.1} parent=1 // loop_footer_branch
      %24 = sbr.rel target = $region3
    $region8: #{tpu_custom_call.1} parent=1 // loop_exit
      _
    %1022 = vsyncpa [#allocation3], 1
    %s1023 = scalar_lea.sflag [#allocation3], 1
    %1024 = vsyncpa %s1023, 1
    %1025 = vsyncpa [#allocation6], 1
    %1026 = vsyncpa [#allocation4], 1
    %s1027 = scalar_lea.sflag [#allocation4], 1
    %1028 = vsyncpa %s1027, 1

</llo_original>
